<compile_context>
chip_gen: v6e
topology: v6e:2x2x1
jax: 0.10.0
libtpu: 0.0.40
codegen_flags: <defaults>
</compile_context>

<pallas_src>
import jax
import jax.numpy as jnp
from jax.experimental import pallas as pl
from jax.experimental.pallas import tpu as pltpu


# ----------------------------------------------------------------------------- utils
def _round_up(n, m):
    return ((n + m - 1) // m) * m


def _pad2(a, rows, cols):
    return jnp.pad(a, ((0, rows - a.shape[0]), (0, cols - a.shape[1])))


# ----------------------------------------------------------------------------- kernels
def _sage_layer_kernel(a_ref, x_ref, dinv_ref, wl_ref, wr_ref, b_ref, o_ref, acc_ref):
    """One fused SAGEConv layer (BN folded, ReLU) for one tile of output rows.

    grid = (node_tiles, k_tiles)
      a_ref   : (TM, TK)      int8 0/1 adjacency tile (streamed)
      x_ref   : (n_pad, F)    bf16, VMEM-resident full X
      dinv_ref: (TM, 1)       f32 inverse in-degree rows for this i-tile
      wl_ref  : (F, H)        bf16 folded neighbor weight
      wr_ref  : (F, H)        bf16 folded root weight
      b_ref   : (1, H)        f32 folded bias
      o_ref   : (TM, H)       bf16 output rows
      acc_ref : (TM, F)       f32 aggregation accumulator (scratch)
    """
    i = pl.program_id(0)
    k = pl.program_id(1)
    tm, tk = a_ref.shape

    # Aggregation partial: (0/1 A tile upcast to bf16) @ X[k-tile]  -> f32 accumulate.
    xk = x_ref[pl.ds(pl.multiple_of(k * tk, 128), tk), :]
    part = jnp.dot(a_ref[...].astype(jnp.bfloat16), xk,
                   preferred_element_type=jnp.float32)

    @pl.when(k == 0)
    def _first():
        acc_ref[...] = part

    @pl.when(k > 0)
    def _rest():
        acc_ref[...] += part

    @pl.when(k == pl.num_programs(1) - 1)
    def _finalize():
        # Mean normalization (exact f32 per-row scale), then the two fused projections.
        agg = (acc_ref[...] * dinv_ref[...]).astype(jnp.bfloat16)
        x_self = x_ref[pl.ds(pl.multiple_of(i * tm, 128), tm), :]
        h = (jnp.dot(agg, wl_ref[...], preferred_element_type=jnp.float32)
             + jnp.dot(x_self, wr_ref[...], preferred_element_type=jnp.float32)
             + b_ref[...])
        o_ref[...] = jnp.maximum(h, 0.0).astype(o_ref.dtype)


def _pool_kernel(p_ref, h_ref, o_ref):
    """global (sum) pool as a tiled P @ H matmul accumulated into the output block."""
    k = pl.program_id(0)
    part = jnp.dot(p_ref[...], h_ref[...], preferred_element_type=jnp.float32)

    @pl.when(k == 0)
    def _first():
        o_ref[...] = part

    @pl.when(k > 0)
    def _rest():
        o_ref[...] += part


# ----------------------------------------------------------------------------- wrappers
def _sage_layer(A_i8, x_bf16, dinv, wl, wr, b_row, tm, tk):
    n_pad, f_pad = x_bf16.shape
    h_pad = wl.shape[1]
    return pl.pallas_call(
        _sage_layer_kernel,
        out_shape=jax.ShapeDtypeStruct((n_pad, h_pad), jnp.bfloat16),
        grid_spec=pltpu.PrefetchScalarGridSpec(
            num_scalar_prefetch=0,
            grid=(n_pad // tm, n_pad // tk),
            in_specs=[
                pl.BlockSpec((tm, tk), lambda i, k: (i, k)),         # A tile (int8 0/1)
                pl.BlockSpec((n_pad, f_pad), lambda i, k: (0, 0)),   # X resident (bf16)
                pl.BlockSpec((tm, 1), lambda i, k: (i, 0)),          # 1/deg rows (f32)
                pl.BlockSpec((f_pad, h_pad), lambda i, k: (0, 0)),   # W_l (bf16)
                pl.BlockSpec((f_pad, h_pad), lambda i, k: (0, 0)),   # W_r (bf16)
                pl.BlockSpec((1, h_pad), lambda i, k: (0, 0)),       # folded bias (f32)
            ],
            out_specs=pl.BlockSpec((tm, h_pad), lambda i, k: (i, 0)),
            scratch_shapes=[pltpu.VMEM((tm, f_pad), jnp.float32)],
        ),
        compiler_params=pltpu.CompilerParams(
            dimension_semantics=("parallel", "arbitrary")),
    )(A_i8, x_bf16, dinv, wl, wr, b_row)


def _sum_pool(P_bin, h, tk):
    g_pad, n_pad = P_bin.shape
    h_pad = h.shape[1]
    return pl.pallas_call(
        _pool_kernel,
        out_shape=jax.ShapeDtypeStruct((g_pad, h_pad), jnp.float32),
        grid_spec=pltpu.PrefetchScalarGridSpec(
            num_scalar_prefetch=0,
            grid=(n_pad // tk,),
            in_specs=[
                pl.BlockSpec((g_pad, tk), lambda k: (0, k)),
                pl.BlockSpec((tk, h_pad), lambda k: (k, 0)),
            ],
            out_specs=pl.BlockSpec((g_pad, h_pad), lambda k: (0, 0)),
        ),
        compiler_params=pltpu.CompilerParams(
            dimension_semantics=("arbitrary",)),
    )(P_bin, h)


def age_sage_forward(x, edge_index, batch, num_graphs, params):
    """Eval-mode forward of AgeSAGE. Returns shape [num_graphs]."""
    x = x.astype(jnp.float32)
    N = x.shape[0]
    hid = params["wl1"].shape[1]

    F_PAD = 128                         # lane-pad input features
    H_PAD = 128                         # lane-pad hidden features

    # Adaptive node / K tiles: cap at 512 (best measured HBM-roofline fraction),
    # but never pad a tiny graph up to 512 nodes.  512x512 int8 A tiles double-
    # buffer in ~0.5 MiB, well inside every generation's scoped-VMEM default.
    TM = TK = min(512, _round_up(N, 128))
    n_pad = _round_up(N, TM)
    g_pad = _round_up(num_graphs, 8)

    src, dst = edge_index[0], edge_index[1]

    # Unnormalized 0/1 adjacency stored directly as int8 (exact; half the bf16 bytes).
    A = jnp.zeros((n_pad, n_pad), jnp.int8).at[dst, src].add(
        jnp.ones(src.shape, jnp.int8))
    # In-degree straight from the edge list (O(E), no dense intermediate).
    deg = jnp.zeros((n_pad,), jnp.float32).at[dst].add(1.0)
    dinv = (1.0 / jnp.maximum(deg, 1.0)).reshape(n_pad, 1)

    # Binary pool matrix (bf16, exact); mean normalization applied after the kernel.
    P = jnp.zeros((g_pad, n_pad), jnp.bfloat16).at[batch, jnp.arange(N)].set(1.0)
    cnt = jnp.zeros((g_pad,), jnp.float32).at[batch].add(1.0)

    # Fold eval-mode BatchNorm1d into the SAGEConv weights / bias; weights in bf16.
    eps = 1e-5
    s1 = params["bn1_gamma"] * jax.lax.rsqrt(params["bn1_var"] + eps)
    t1 = params["bn1_beta"] - params["bn1_mean"] * s1
    s2 = params["bn2_gamma"] * jax.lax.rsqrt(params["bn2_var"] + eps)
    t2 = params["bn2_beta"] - params["bn2_mean"] * s2

    wl1 = _pad2(params["wl1"] * s1[None, :], F_PAD, H_PAD).astype(jnp.bfloat16)
    wr1 = _pad2(params["wr1"] * s1[None, :], F_PAD, H_PAD).astype(jnp.bfloat16)
    b1 = jnp.pad(params["b1"] * s1 + t1, (0, H_PAD - hid)).reshape(1, H_PAD)
    wl2 = _pad2(params["wl2"] * s2[None, :], H_PAD, H_PAD).astype(jnp.bfloat16)
    wr2 = _pad2(params["wr2"] * s2[None, :], H_PAD, H_PAD).astype(jnp.bfloat16)
    b2 = jnp.pad(params["b2"] * s2 + t2, (0, H_PAD - hid)).reshape(1, H_PAD)

    x0 = _pad2(x, n_pad, F_PAD).astype(jnp.bfloat16)

    h1 = _sage_layer(A, x0, dinv, wl1, wr1, b1, TM, TK)   # [n_pad, H_PAD] bf16
    h2 = _sage_layer(A, h1, dinv, wl2, wr2, b2, TM, TK)   # [n_pad, H_PAD] bf16

    # Pool with a large K tile (each step moves >1 MiB for big graphs).
    tk_pool = min(n_pad, 2048)
    if n_pad % tk_pool != 0:
        tk_pool = TM
    pooled = _sum_pool(P, h2, tk_pool)                    # [g_pad, H_PAD] f32 sums

    # Mean normalization + final Linear(hid, 1) + squeeze in the wrapper
    # (a [G, 1] kernel output would force masked, lane-sparse stores).
    pooled = pooled[:num_graphs, :hid] / jnp.maximum(cnt[:num_graphs, None], 1.0)
    out = pooled @ params["wlin"] + params["blin"]
    return jnp.squeeze(out, axis=-1)


# ----------------------------------------------------------------------------- reference
def reference_forward(x, edge_index, batch, num_graphs, params):
    """Pure-JAX f32 reference (same math) for verification."""
    x = x.astype(jnp.float32)
    N = x.shape[0]
    src, dst = edge_index[0], edge_index[1]
    A = jnp.zeros((N, N), jnp.float32).at[dst, src].add(1.0)
    A = A / jnp.maximum(jnp.sum(A, axis=1, keepdims=True), 1.0)
    P = jnp.zeros((num_graphs, N), jnp.float32).at[batch, jnp.arange(N)].set(1.0)
    P = P / jnp.maximum(jnp.sum(P, axis=1, keepdims=True), 1.0)
    eps = 1e-5

    def bn(h, g, b, m, v):
        return (h - m) / jnp.sqrt(v + eps) * g + b

    h = A @ x @ params["wl1"] + x @ params["wr1"] + params["b1"]
    h = jnp.maximum(bn(h, params["bn1_gamma"], params["bn1_beta"],
                       params["bn1_mean"], params["bn1_var"]), 0.0)
    h2 = A @ h @ params["wl2"] + h @ params["wr2"] + params["b2"]
    h2 = jnp.maximum(bn(h2, params["bn2_gamma"], params["bn2_beta"],
                        params["bn2_mean"], params["bn2_var"]), 0.0)
    pooled = P @ h2
    return jnp.squeeze(pooled @ params["wlin"] + params["blin"], axis=-1)


def init_params(key, in_dim=3, hid=32):
    ks = jax.random.split(key, 10)
    return {
        # SAGEConv: lin_l (neighbor) has bias, lin_r (root) no bias. Stored [in, out].
        "wl1": jax.random.normal(ks[0], (in_dim, hid), jnp.float32) * 0.2,
        "wr1": jax.random.normal(ks[1], (in_dim, hid), jnp.float32) * 0.2,
        "b1": jax.random.normal(ks[2], (hid,), jnp.float32) * 0.05,
        "wl2": jax.random.normal(ks[3], (hid, hid), jnp.float32) * 0.1,
        "wr2": jax.random.normal(ks[4], (hid, hid), jnp.float32) * 0.1,
        "b2": jax.random.normal(ks[5], (hid,), jnp.float32) * 0.05,
        # BatchNorm1d running stats / affine params.
        "bn1_gamma": 1.0 + 0.1 * jax.random.normal(ks[6], (hid,), jnp.float32),
        "bn1_beta": 0.05 * jax.random.normal(ks[7], (hid,), jnp.float32),
        "bn1_mean": jnp.zeros((hid,), jnp.float32),
        "bn1_var": jnp.ones((hid,), jnp.float32),
        "bn2_gamma": 1.0 + 0.1 * jax.random.normal(ks[8], (hid,), jnp.float32),
        "bn2_beta": 0.05 * jax.random.normal(ks[9], (hid,), jnp.float32),
        "bn2_mean": jnp.zeros((hid,), jnp.float32),
        "bn2_var": jnp.ones((hid,), jnp.float32),
        # Final Linear(hid, 1), stored [hid, 1].
        "wlin": jax.random.normal(jax.random.fold_in(key, 100), (hid, 1), jnp.float32) * 0.1,
        "blin": jnp.array([0.1], jnp.float32),
    }


if __name__ == "__main__":
    key = jax.random.PRNGKey(0)
    in_dim, hid = 3, 32
    N, G = 8, 2  # 8 nodes total, 2 graphs of 4 nodes each

    params = init_params(key, in_dim, hid)
    x = jax.random.normal(jax.random.fold_in(key, 1), (N, in_dim), jnp.float32)

    # Two 4-node directed rings (both directions), one per graph.
    src = jnp.array([0, 1, 2, 3, 1, 2, 3, 0, 4, 5, 6, 7, 5, 6, 7, 4], jnp.int32)
    dst = jnp.array([1, 2, 3, 0, 0, 1, 2, 3, 5, 6, 7, 4, 4, 5, 6, 7], jnp.int32)
    edge_index = jnp.stack([src, dst], axis=0)
    batch = jnp.array([0, 0, 0, 0, 1, 1, 1, 1], jnp.int32)

    out = age_sage_forward(x, edge_index, batch, G, params)
    out = jax.block_until_ready(out)

    ref = reference_forward(x, edge_index, batch, G, params)
    assert out.shape == (G,), out.shape
    # bf16 activations / weights on the matmul paths -> slightly loosened tolerance
    # (adjacency + degree normalization are now exact).
    assert jnp.allclose(out, ref, rtol=2e-2, atol=2e-2), (out, ref)

    print("KERNEL_OK")
</pallas_src>

<mosaic_0001>
module attributes {stable_mosaic.version = 11 : i64} {
  func.func @_sage_layer_kernel(%arg0: i32, %arg1: i32, %arg2: memref<128x128xi8, #tpu.memory_space<vmem>>, %arg3: memref<128x128xbf16, #tpu.memory_space<vmem>>, %arg4: memref<128x1xf32, #tpu.memory_space<vmem>>, %arg5: memref<128x128xbf16, #tpu.memory_space<vmem>>, %arg6: memref<128x128xbf16, #tpu.memory_space<vmem>>, %arg7: memref<1x128xf32, #tpu.memory_space<vmem>>, %arg8: memref<128x128xbf16, #tpu.memory_space<vmem>>, %arg9: memref<128x128xf32, #tpu.memory_space<vmem>>) attributes {dimension_semantics = [#tpu.dimension_semantics<parallel>, #tpu.dimension_semantics<arbitrary>], iteration_bounds = array<i64: 1, 1>, scalar_prefetch = 0 : i64, scratch_operands = 1 : i64, tpu.core_type = #tpu.core_type<tc>, window_params = [{transform_indices = @transform_0, window_bounds = array<i64: 128, 128>}, {pipeline_mode = #tpu.pipeline_mode<synchronous>, transform_indices = @transform_1, window_bounds = array<i64: 128, 128>}, {transform_indices = @transform_2, window_bounds = array<i64: 128, 1>}, {pipeline_mode = #tpu.pipeline_mode<synchronous>, transform_indices = @transform_3, window_bounds = array<i64: 128, 128>}, {pipeline_mode = #tpu.pipeline_mode<synchronous>, transform_indices = @transform_4, window_bounds = array<i64: 128, 128>}, {pipeline_mode = #tpu.pipeline_mode<synchronous>, transform_indices = @transform_5, window_bounds = array<i64: 1, 128>}, {transform_indices = @transform_6, window_bounds = array<i64: 128, 128>}]} {
    %c128_i32 = arith.constant 128 : i32
    %0 = arith.muli %arg1, %c128_i32 : i32
    %1 = tpu.assume_multiple %0, 128 : i32
    %2 = arith.index_cast %1 : i32 to index
    %c0 = arith.constant 0 : index
    %3 = vector.load %arg3[%2, %c0] : memref<128x128xbf16, #tpu.memory_space<vmem>>, vector<128x128xbf16>
    %c0_0 = arith.constant 0 : index
    %c0_1 = arith.constant 0 : index
    %4 = vector.load %arg2[%c0_0, %c0_1] : memref<128x128xi8, #tpu.memory_space<vmem>>, vector<128x128xi8>
    %5 = arith.sitofp %4 : vector<128x128xi8> to vector<128x128xbf16>
    %cst = arith.constant dense<0.000000e+00> : vector<128x128xf32>
    %6 = tpu.matmul %5, %3, %cst {dimension_numbers = #tpu.dot_dimension_numbers<[1], [0], [0], [1], [0, 0, 1, 1], [], []>} : vector<128x128xbf16>, vector<128x128xbf16>, vector<128x128xf32> -> vector<128x128xf32>
    %c0_i32 = arith.constant 0 : i32
    %7 = arith.cmpi eq, %arg1, %c0_i32 : i32
    %8 = arith.extui %7 : i1 to i32
    %c0_i32_2 = arith.constant 0 : i32
    %9 = arith.cmpi ne, %8, %c0_i32_2 : i32
    scf.if %9 {
      %c0_7 = arith.constant 0 : index
      %c0_8 = arith.constant 0 : index
      %16 = vector.load %arg9[%c0_7, %c0_8] : memref<128x128xf32, #tpu.memory_space<vmem>>, vector<128x128xf32>
      tpu.vector_store %arg9[%c0_7, %c0_8], %6 {strides = array<i32>} : memref<128x128xf32, #tpu.memory_space<vmem>>, vector<128x128xf32>,
    } else {
    }
    %c0_i32_3 = arith.constant 0 : i32
    %10 = arith.cmpi sgt, %arg1, %c0_i32_3 : i32
    %11 = arith.extui %10 : i1 to i32
    %c0_i32_4 = arith.constant 0 : i32
    %12 = arith.cmpi ne, %11, %c0_i32_4 : i32
    scf.if %12 {
      %c0_7 = arith.constant 0 : index
      %c0_8 = arith.constant 0 : index
      %16 = vector.load %arg9[%c0_7, %c0_8] : memref<128x128xf32, #tpu.memory_space<vmem>>, vector<128x128xf32>
      %17 = arith.addf %16, %6 : vector<128x128xf32>
      %c0_9 = arith.constant 0 : index
      %c0_10 = arith.constant 0 : index
      %18 = vector.load %arg9[%c0_9, %c0_10] : memref<128x128xf32, #tpu.memory_space<vmem>>, vector<128x128xf32>
      tpu.vector_store %arg9[%c0_9, %c0_10], %17 {strides = array<i32>} : memref<128x128xf32, #tpu.memory_space<vmem>>, vector<128x128xf32>,
    } else {
    }
    %c0_i32_5 = arith.constant 0 : i32
    %13 = arith.cmpi eq, %arg1, %c0_i32_5 : i32
    %14 = arith.extui %13 : i1 to i32
    %c0_i32_6 = arith.constant 0 : i32
    %15 = arith.cmpi ne, %14, %c0_i32_6 : i32
    scf.if %15 {
      %c0_7 = arith.constant 0 : index
      %c0_8 = arith.constant 0 : index
      %16 = vector.load %arg9[%c0_7, %c0_8] : memref<128x128xf32, #tpu.memory_space<vmem>>, vector<128x128xf32>
      %c0_9 = arith.constant 0 : index
      %c0_10 = arith.constant 0 : index
      %17 = vector.load %arg4[%c0_9, %c0_10] : memref<128x1xf32, #tpu.memory_space<vmem>>, vector<128x1xf32>
      %18 = vector.broadcast %17 : vector<128x1xf32> to vector<128x128xf32>
      %19 = arith.mulf %16, %18 : vector<128x128xf32>
      %20 = arith.truncf %19 : vector<128x128xf32> to vector<128x128xbf16>
      %c128_i32_11 = arith.constant 128 : i32
      %21 = arith.muli %arg0, %c128_i32_11 : i32
      %22 = tpu.assume_multiple %21, 128 : i32
      %23 = arith.index_cast %22 : i32 to index
      %c0_12 = arith.constant 0 : index
      %24 = vector.load %arg3[%23, %c0_12] : memref<128x128xbf16, #tpu.memory_space<vmem>>, vector<128x128xbf16>
      %c0_13 = arith.constant 0 : index
      %c0_14 = arith.constant 0 : index
      %25 = vector.load %arg5[%c0_13, %c0_14] : memref<128x128xbf16, #tpu.memory_space<vmem>>, vector<128x128xbf16>
      %cst_15 = arith.constant dense<0.000000e+00> : vector<128x128xf32>
      %26 = tpu.matmul %20, %25, %cst_15 {dimension_numbers = #tpu.dot_dimension_numbers<[1], [0], [0], [1], [0, 0, 1, 1], [], []>} : vector<128x128xbf16>, vector<128x128xbf16>, vector<128x128xf32> -> vector<128x128xf32>
      %c0_16 = arith.constant 0 : index
      %c0_17 = arith.constant 0 : index
      %27 = vector.load %arg6[%c0_16, %c0_17] : memref<128x128xbf16, #tpu.memory_space<vmem>>, vector<128x128xbf16>
      %cst_18 = arith.constant dense<0.000000e+00> : vector<128x128xf32>
      %28 = tpu.matmul %24, %27, %cst_18 {dimension_numbers = #tpu.dot_dimension_numbers<[1], [0], [0], [1], [0, 0, 1, 1], [], []>} : vector<128x128xbf16>, vector<128x128xbf16>, vector<128x128xf32> -> vector<128x128xf32>
      %29 = arith.addf %26, %28 : vector<128x128xf32>
      %c0_19 = arith.constant 0 : index
      %c0_20 = arith.constant 0 : index
      %30 = vector.load %arg7[%c0_19, %c0_20] : memref<1x128xf32, #tpu.memory_space<vmem>>, vector<1x128xf32>
      %31 = vector.broadcast %30 : vector<1x128xf32> to vector<128x128xf32>
      %32 = arith.addf %29, %31 : vector<128x128xf32>
      %cst_21 = arith.constant 0.000000e+00 : f32
      %33 = vector.broadcast %cst_21 : f32 to vector<128x128xf32>
      %34 = arith.maximumf %32, %33 : vector<128x128xf32>
      %35 = arith.truncf %34 : vector<128x128xf32> to vector<128x128xbf16>
      %c0_22 = arith.constant 0 : index
      %c0_23 = arith.constant 0 : index
      %36 = vector.load %arg8[%c0_22, %c0_23] : memref<128x128xbf16, #tpu.memory_space<vmem>>, vector<128x128xbf16>
      tpu.vector_store %arg8[%c0_22, %c0_23], %35 {strides = array<i32>} : memref<128x128xbf16, #tpu.memory_space<vmem>>, vector<128x128xbf16>,
    } else {
    }
    return
  }
  func.func @transform_0(%arg0: i32, %arg1: i32) -> (i32, i32) {
    %c0_i32 = arith.constant 0 : i32
    return %arg0, %arg1 : i32, i32
  }
  func.func @transform_1(%arg0: i32, %arg1: i32) -> (i32, i32) {
    %c0_i32 = arith.constant 0 : i32
    %c0_i32_0 = arith.constant 0 : i32
    %c0_i32_1 = arith.constant 0 : i32
    return %c0_i32, %c0_i32_0 : i32, i32
  }
  func.func @transform_2(%arg0: i32, %arg1: i32) -> (i32, i32) {
    %c0_i32 = arith.constant 0 : i32
    %c0_i32_0 = arith.constant 0 : i32
    return %arg0, %c0_i32 : i32, i32
  }
  func.func @transform_3(%arg0: i32, %arg1: i32) -> (i32, i32) {
    %c0_i32 = arith.constant 0 : i32
    %c0_i32_0 = arith.constant 0 : i32
    %c0_i32_1 = arith.constant 0 : i32
    return %c0_i32, %c0_i32_0 : i32, i32
  }
  func.func @transform_4(%arg0: i32, %arg1: i32) -> (i32, i32) {
    %c0_i32 = arith.constant 0 : i32
    %c0_i32_0 = arith.constant 0 : i32
    %c0_i32_1 = arith.constant 0 : i32
    return %c0_i32, %c0_i32_0 : i32, i32
  }
  func.func @transform_5(%arg0: i32, %arg1: i32) -> (i32, i32) {
    %c0_i32 = arith.constant 0 : i32
    %c0_i32_0 = arith.constant 0 : i32
    %c0_i32_1 = arith.constant 0 : i32
    return %c0_i32, %c0_i32_0 : i32, i32
  }
  func.func @transform_6(%arg0: i32, %arg1: i32) -> (i32, i32) {
    %c0_i32 = arith.constant 0 : i32
    %c0_i32_0 = arith.constant 0 : i32
    return %arg0, %c0_i32 : i32, i32
  }
}

</mosaic_0001>

<llo_original>
// kernel: tpu_custom_call.1
$region0: #{tpu_custom_call.1}
  #allocation0 [shape = 'u32[]', space=smem, size = 0x4, offset = 0x4, fixed_abs, tag = 'smem constant byte address 0x4 - core index']
  #allocation1 [shape = 'u32[144,128]{1,0:T(1,128)}', space=vmem, size = 0x12000, scoped, tag = 'internal scratch']
  #allocation2 [shape = 'f32[128,128]{1,0:T(8,128)}', space=vmem, size = 0x10000, scoped, tag = 'scratch operand']
  %s0 = inlined_call_operand.hbm [shape: s8[128,128], index: 0, kind: input, shape index: {}]
  %s1 = inlined_call_operand.vmem [shape: bf16[128,128], index: 1, kind: input, shape index: {}]
  %s2 = inlined_call_operand.vmem [shape: f32[128,1], index: 2, kind: input, shape index: {}]
  %s3 = inlined_call_operand.vmem [shape: bf16[128,128], index: 3, kind: input, shape index: {}]
  %s4 = inlined_call_operand.hbm [shape: bf16[128,128], index: 4, kind: input, shape index: {}]
  %s5 = inlined_call_operand.vmem [shape: f32[1,128], index: 5, kind: input, shape index: {}]
  %s6 = inlined_call_operand.hbm [shape: bf16[128,128], index: 6, kind: output, shape index: {}]
  %s7 = sld [smem:[#allocation0]]
  $region54: #{tpu_custom_call.1} parent=0
    _
  %s9 = ssub.s32 1, %s7
  %s10 = scalar_select 0, %s9, %s7
  $region1: #{tpu_custom_call.1} parent=0
    #allocation3 [shape = 'u8[16384]{0}', space=vmem, size = 0x4000, scoped, tag = 'input window, operand 0, single buffered']
    #allocation4 [shape = 's32[1]{0}', space=sflag, size = 0x4, scoped, tag = 'scoped memory for tpu_custom_call.1']
    #allocation5 [shape = 's32[1]{0}', space=sflag, size = 0x4, scoped, tag = 'scoped memory for tpu_custom_call.1']
    #allocation6 [shape = 'u8[32768]{0}', space=vmem, size = 0x8000, scoped, tag = 'input window, operand 4, single buffered']
    #allocation7 [shape = 's32[1]{0}', space=sflag, size = 0x4, scoped, tag = 'scoped memory for tpu_custom_call.1']
    #allocation8 [shape = 'u8[32768]{0}', space=vmem, size = 0x8000, scoped, tag = 'output window, operand 0, single buffered']
    %11 = vsyncpa [#allocation4], 0
    %12 = vsyncpa [#allocation7], 0
    %13 = vsyncpa [#allocation5], 0
    // Predicated region
    $region2: #{tpu_custom_call.1} parent=1 // pred_check
      _
    $region3: #{tpu_custom_call.1} parent=1 // pred_check_branch
      %15 = sbr.rel (0) target = $region5
    $region4: #{tpu_custom_call.1} parent=1 // pred_region
      %s17 = ssub.s32 512, 512
      %18 = vsyncadd [#allocation4], %s17
      %s19 = sshll.u32 [#allocation3], 4
      %s20 = int_to_ptr.vmem [resolvable:$true] %s19
      %25 = dma.hbm_to_vmem [thread:$0]  %s0, 512, %s20, [#allocation4], 128, 128, 8
    $region5: #{tpu_custom_call.1} parent=1 // pred_fallthru
      _
    // Predicated region
    $region6: #{tpu_custom_call.1} parent=1 // pred_check
      _
    $region7: #{tpu_custom_call.1} parent=1 // pred_check_branch
      %27 = sbr.rel (0) target = $region9
    $region8: #{tpu_custom_call.1} parent=1 // pred_region
      _
    $region9: #{tpu_custom_call.1} parent=1 // pred_fallthru
      _
    // Predicated region
    $region10: #{tpu_custom_call.1} parent=1 // pred_check
      _
    $region11: #{tpu_custom_call.1} parent=1 // pred_check_branch
      %29 = sbr.rel (0) target = $region13
    $region12: #{tpu_custom_call.1} parent=1 // pred_region
      _
    $region13: #{tpu_custom_call.1} parent=1 // pred_fallthru
      _
    // Predicated region
    $region14: #{tpu_custom_call.1} parent=1 // pred_check
      _
    $region15: #{tpu_custom_call.1} parent=1 // pred_check_branch
      %31 = sbr.rel (0) target = $region17
    $region16: #{tpu_custom_call.1} parent=1 // pred_region
      _
    $region17: #{tpu_custom_call.1} parent=1 // pred_fallthru
      _
    // Predicated region
    $region18: #{tpu_custom_call.1} parent=1 // pred_check
      _
    $region19: #{tpu_custom_call.1} parent=1 // pred_check_branch
      %33 = sbr.rel (0) target = $region21
    $region20: #{tpu_custom_call.1} parent=1 // pred_region
      %s35 = ssub.s32 1024, 1024
      %36 = vsyncadd [#allocation7], %s35
      %s37 = sshll.u32 [#allocation6], 4
      %s38 = int_to_ptr.vmem [resolvable:$true] %s37
      %43 = dma.hbm_to_vmem [thread:$0]  %s4, 1024, %s38, [#allocation7], 64, 64, 4
    $region21: #{tpu_custom_call.1} parent=1 // pred_fallthru
      _
    // Predicated region
    $region22: #{tpu_custom_call.1} parent=1 // pred_check
      _
    $region23: #{tpu_custom_call.1} parent=1 // pred_check_branch
      %45 = sbr.rel (0) target = $region25
    $region24: #{tpu_custom_call.1} parent=1 // pred_region
      _
    $region25: #{tpu_custom_call.1} parent=1 // pred_fallthru
      _
    // Predicated region
    $region26: #{tpu_custom_call.1} parent=1 // pred_check
      _
    $region27: #{tpu_custom_call.1} parent=1 // pred_check_branch
      %47 = sbr.rel (0) target = $region29
    $region28: #{tpu_custom_call.1} parent=1 // pred_region
      %48 = dma.done [#allocation4], 512
    $region29: #{tpu_custom_call.1} parent=1 // pred_fallthru
      _
    // Predicated region
    $region30: #{tpu_custom_call.1} parent=1 // pred_check
      _
    $region31: #{tpu_custom_call.1} parent=1 // pred_check_branch
      %50 = sbr.rel (0) target = $region33
    $region32: #{tpu_custom_call.1} parent=1 // pred_region
      %51 = dma.done [#allocation7], 1024
    $region33: #{tpu_custom_call.1} parent=1 // pred_fallthru
      _
    %s53 = smul.u32 0, 128
    %s54 = sshra.s32 %s53, 3
    %s55 = sand.u32 %s53, 7
    %s56 = smul.addr %s54, 4
    %s57 = scalar_lea.vmem %s1, %s56
    %v58 = vld [vmem:[%s57] sm:$0xf]
    %v59 = vld [vmem:[%s57 + $0x4] sm:$0xf]
    %v60 = vld [vmem:[%s57 + $0x8] sm:$0xf]
    %v61 = vld [vmem:[%s57 + $0xc] sm:$0xf]
    %v62 = vld [vmem:[%s57 + $0x10] sm:$0xf]
    %v63 = vld [vmem:[%s57 + $0x14] sm:$0xf]
    %v64 = vld [vmem:[%s57 + $0x18] sm:$0xf]
    %v65 = vld [vmem:[%s57 + $0x1c] sm:$0xf]
    %v66 = vld [vmem:[%s57 + $0x20] sm:$0xf]
    %v67 = vld [vmem:[%s57 + $0x24] sm:$0xf]
    %v68 = vld [vmem:[%s57 + $0x28] sm:$0xf]
    %v69 = vld [vmem:[%s57 + $0x2c] sm:$0xf]
    %v70 = vld [vmem:[%s57 + $0x30] sm:$0xf]
    %v71 = vld [vmem:[%s57 + $0x34] sm:$0xf]
    %v72 = vld [vmem:[%s57 + $0x38] sm:$0xf]
    %v73 = vld [vmem:[%s57 + $0x3c] sm:$0xf]
    %v74 = vld [vmem:[#allocation3] sm:$0xff]
    %v75 = vld [vmem:[#allocation3 + $0x8] sm:$0xff]
    %v76 = vld [vmem:[#allocation3 + $0x10] sm:$0xff]
    %v77 = vld [vmem:[#allocation3 + $0x18] sm:$0xff]
    %v78 = vunpack.c.l.s8.bf16 %v74
    %v79 = vunpack.c.h.s8.bf16 %v74
    %v80 = vunpack.c.l.s8.bf16 %v75
    %v81 = vunpack.c.h.s8.bf16 %v75
    %v82 = vunpack.c.l.s8.bf16 %v76
    %v83 = vunpack.c.h.s8.bf16 %v76
    %v84 = vunpack.c.l.s8.bf16 %v77
    %v85 = vunpack.c.h.s8.bf16 %v77
    %v102 = vunpack.c.l.b16 %v58
    %v103 = vunpack.c.l.b16 %v59
    %v104 = vunpack.c.l.b16 %v60
    %v105 = vunpack.c.l.b16 %v61
    %v106 = vunpack.c.l.b16 %v62
    %v107 = vunpack.c.l.b16 %v63
    %v108 = vunpack.c.l.b16 %v64
    %v109 = vunpack.c.l.b16 %v65
    %v110 = vunpack.c.l.b16 %v66
    %v111 = vunpack.c.l.b16 %v67
    %v112 = vunpack.c.l.b16 %v68
    %v113 = vunpack.c.l.b16 %v69
    %v114 = vunpack.c.l.b16 %v70
    %v115 = vunpack.c.l.b16 %v71
    %v116 = vunpack.c.l.b16 %v72
    %v117 = vunpack.c.l.b16 %v73
    %v118 = vpack.c.b16 %v103, %v102
    %v119 = vpack.c.b16 %v105, %v104
    %v120 = vpack.c.b16 %v107, %v106
    %v121 = vpack.c.b16 %v109, %v108
    %v122 = vpack.c.b16 %v111, %v110
    %v123 = vpack.c.b16 %v113, %v112
    %v124 = vpack.c.b16 %v115, %v114
    %v125 = vpack.c.b16 %v117, %v116
    %134 = vmatprep.subr.bf16.mxu0 0
    %135 = vmatpush1.bf16.msra.mxu0 %v125
    %136 = vmatprep.subr.bf16.mxu0 0
    %137 = vmatpush1.bf16.msra.mxu0 %v124
    %138 = vmatprep.subr.bf16.mxu0 0
    %139 = vmatpush1.bf16.msra.mxu0 %v123
    %140 = vmatprep.subr.bf16.mxu0 0
    %141 = vmatpush1.bf16.msra.mxu0 %v122
    %142 = vmatprep.subr.bf16.mxu0 0
    %143 = vmatpush1.bf16.msra.mxu0 %v121
    %144 = vmatprep.subr.bf16.mxu0 0
    %145 = vmatpush1.bf16.msra.mxu0 %v120
    %146 = vmatprep.subr.bf16.mxu0 0
    %147 = vmatpush1.bf16.msra.mxu0 %v119
    %148 = vmatprep.subr.bf16.mxu0 0
    %149 = vmatpush1.bf16.msra.mxu0 %v118
    %150 = vmatprep.subr.bf16.mxu0 0
    %151 = vmatpush2.bf16.msra.mxu0 0
    %152 = vmatprep.subr.bf16.mxu0 0
    %153 = vmatpush2.bf16.msra.mxu0 0
    %154 = vmatprep.subr.bf16.mxu0 0
    %155 = vmatpush2.bf16.msra.mxu0 0
    %156 = vmatprep.subr.bf16.mxu0 0
    %157 = vmatpush2.bf16.msra.mxu0 0
    %158 = vmatprep.subr.bf16.mxu0 0
    %159 = vmatpush2.bf16.msra.mxu0 0
    %160 = vmatprep.subr.bf16.mxu0 0
    %161 = vmatpush2.bf16.msra.mxu0 0
    %162 = vmatprep.subr.bf16.mxu0 0
    %163 = vmatpush2.bf16.msra.mxu0 0
    %164 = vmatprep.subr.bf16.mxu0 0
    %165 = vmatpush2.bf16.msra.mxu0 0
    %166 = vmatprep.mubr.bf16.mxu0 0
    %167 = vmatmul.mubr.bf16.gmra.mxu0 %v78
    %v168 = vpop.f32.mrf.mxu0
    %v169 = vadd.f32 0.0, %v168
    %v170 = vpop.f32.mrf.mxu0
    %v171 = vpop.f32.mrf.mxu0
    %v172 = vadd.f32 0.0, %v171
    %v173 = vpop.f32.mrf.mxu0
    %174 = vmatprep.mubr.bf16.mxu0 0
    %175 = vmatmul.mubr.bf16.gmra.mxu0 %v79
    %v176 = vpop.f32.mrf.mxu0
    %v177 = vadd.f32 0.0, %v176
    %v178 = vpop.f32.mrf.mxu0
    %v179 = vpop.f32.mrf.mxu0
    %v180 = vadd.f32 0.0, %v179
    %v181 = vpop.f32.mrf.mxu0
    %182 = vmatprep.mubr.bf16.mxu0 0
    %183 = vmatmul.mubr.bf16.gmra.mxu0 %v80
    %v184 = vpop.f32.mrf.mxu0
    %v185 = vadd.f32 0.0, %v184
    %v186 = vpop.f32.mrf.mxu0
    %v187 = vpop.f32.mrf.mxu0
    %v188 = vadd.f32 0.0, %v187
    %v189 = vpop.f32.mrf.mxu0
    %190 = vmatprep.mubr.bf16.mxu0 0
    %191 = vmatmul.mubr.bf16.gmra.mxu0 %v81
    %v192 = vpop.f32.mrf.mxu0
    %v193 = vadd.f32 0.0, %v192
    %v194 = vpop.f32.mrf.mxu0
    %v195 = vpop.f32.mrf.mxu0
    %v196 = vadd.f32 0.0, %v195
    %v197 = vpop.f32.mrf.mxu0
    %198 = vmatprep.mubr.bf16.mxu0 0
    %199 = vmatmul.mubr.bf16.gmra.mxu0 %v82
    %v200 = vpop.f32.mrf.mxu0
    %v201 = vadd.f32 0.0, %v200
    %v202 = vpop.f32.mrf.mxu0
    %v203 = vpop.f32.mrf.mxu0
    %v204 = vadd.f32 0.0, %v203
    %v205 = vpop.f32.mrf.mxu0
    %206 = vmatprep.mubr.bf16.mxu0 0
    %207 = vmatmul.mubr.bf16.gmra.mxu0 %v83
    %v208 = vpop.f32.mrf.mxu0
    %v209 = vadd.f32 0.0, %v208
    %v210 = vpop.f32.mrf.mxu0
    %v211 = vpop.f32.mrf.mxu0
    %v212 = vadd.f32 0.0, %v211
    %v213 = vpop.f32.mrf.mxu0
    %214 = vmatprep.mubr.bf16.mxu0 0
    %215 = vmatmul.mubr.bf16.gmra.mxu0 %v84
    %v216 = vpop.f32.mrf.mxu0
    %v217 = vadd.f32 0.0, %v216
    %v218 = vpop.f32.mrf.mxu0
    %v219 = vpop.f32.mrf.mxu0
    %v220 = vadd.f32 0.0, %v219
    %v221 = vpop.f32.mrf.mxu0
    %222 = vmatprep.mubr.bf16.mxu0 0
    %223 = vmatmul.mubr.bf16.gmra.mxu0 %v85
    %v224 = vpop.f32.mrf.mxu0
    %v225 = vadd.f32 0.0, %v224
    %v226 = vpop.f32.mrf.mxu0
    %v227 = vpop.f32.mrf.mxu0
    %v228 = vadd.f32 0.0, %v227
    %v229 = vpop.f32.mrf.mxu0
    %230 = vdwg.mxu0
    %p231 = scmp.eq.s32.totalorder 0, 0
    // Predicated region
    $region34: #{tpu_custom_call.1} parent=1 // pred_check
      %p232 = pneg %p231
    $region35: #{tpu_custom_call.1} parent=1 // pred_check_branch
      %234 = sbr.rel (%p232) target = $region37
    $region36: #{tpu_custom_call.1} parent=1 // pred_region
      %235 = vst [vmem:[#allocation2] sm:$0xff] %v169
      %236 = vst [vmem:[#allocation2 + $0x8] sm:$0xff] %v172
      %237 = vst [vmem:[#allocation2 + $0x10] sm:$0xff] %v177
      %238 = vst [vmem:[#allocation2 + $0x18] sm:$0xff] %v180
      %239 = vst [vmem:[#allocation2 + $0x20] sm:$0xff] %v185
      %240 = vst [vmem:[#allocation2 + $0x28] sm:$0xff] %v188
      %241 = vst [vmem:[#allocation2 + $0x30] sm:$0xff] %v193
      %242 = vst [vmem:[#allocation2 + $0x38] sm:$0xff] %v196
      %243 = vst [vmem:[#allocation2 + $0x40] sm:$0xff] %v201
      %244 = vst [vmem:[#allocation2 + $0x48] sm:$0xff] %v204
      %245 = vst [vmem:[#allocation2 + $0x50] sm:$0xff] %v209
      %246 = vst [vmem:[#allocation2 + $0x58] sm:$0xff] %v212
      %247 = vst [vmem:[#allocation2 + $0x60] sm:$0xff] %v217
      %248 = vst [vmem:[#allocation2 + $0x68] sm:$0xff] %v220
      %249 = vst [vmem:[#allocation2 + $0x70] sm:$0xff] %v225
      %250 = vst [vmem:[#allocation2 + $0x78] sm:$0xff] %v228
    $region37: #{tpu_custom_call.1} parent=1 // pred_fallthru
      _
    %p251 = scmp.gt.s32.totalorder 0, 0
    // Predicated region
    $region38: #{tpu_custom_call.1} parent=1 // pred_check
      %p252 = pneg %p251
    $region39: #{tpu_custom_call.1} parent=1 // pred_check_branch
      %254 = sbr.rel (%p252) target = $region41
    $region40: #{tpu_custom_call.1} parent=1 // pred_region
      %v255 = vld [vmem:[#allocation2] sm:$0xff]
      %v256 = vld [vmem:[#allocation2 + $0x8] sm:$0xff]
      %v257 = vld [vmem:[#allocation2 + $0x10] sm:$0xff]
      %v258 = vld [vmem:[#allocation2 + $0x18] sm:$0xff]
      %v259 = vld [vmem:[#allocation2 + $0x20] sm:$0xff]
      %v260 = vld [vmem:[#allocation2 + $0x28] sm:$0xff]
      %v261 = vld [vmem:[#allocation2 + $0x30] sm:$0xff]
      %v262 = vld [vmem:[#allocation2 + $0x38] sm:$0xff]
      %v263 = vld [vmem:[#allocation2 + $0x40] sm:$0xff]
      %v264 = vld [vmem:[#allocation2 + $0x48] sm:$0xff]
      %v265 = vld [vmem:[#allocation2 + $0x50] sm:$0xff]
      %v266 = vld [vmem:[#allocation2 + $0x58] sm:$0xff]
      %v267 = vld [vmem:[#allocation2 + $0x60] sm:$0xff]
      %v268 = vld [vmem:[#allocation2 + $0x68] sm:$0xff]
      %v269 = vld [vmem:[#allocation2 + $0x70] sm:$0xff]
      %v270 = vld [vmem:[#allocation2 + $0x78] sm:$0xff]
      %v271 = vadd.f32 %v255, %v169
      %v272 = vadd.f32 %v256, %v172
      %v273 = vadd.f32 %v257, %v177
      %v274 = vadd.f32 %v258, %v180
      %v275 = vadd.f32 %v259, %v185
      %v276 = vadd.f32 %v260, %v188
      %v277 = vadd.f32 %v261, %v193
      %v278 = vadd.f32 %v262, %v196
      %v279 = vadd.f32 %v263, %v201
      %v280 = vadd.f32 %v264, %v204
      %v281 = vadd.f32 %v265, %v209
      %v282 = vadd.f32 %v266, %v212
      %v283 = vadd.f32 %v267, %v217
      %v284 = vadd.f32 %v268, %v220
      %v285 = vadd.f32 %v269, %v225
      %v286 = vadd.f32 %v270, %v228
      %287 = vst [vmem:[#allocation2] sm:$0xff] %v271
      %288 = vst [vmem:[#allocation2 + $0x8] sm:$0xff] %v272
      %289 = vst [vmem:[#allocation2 + $0x10] sm:$0xff] %v273
      %290 = vst [vmem:[#allocation2 + $0x18] sm:$0xff] %v274
      %291 = vst [vmem:[#allocation2 + $0x20] sm:$0xff] %v275
      %292 = vst [vmem:[#allocation2 + $0x28] sm:$0xff] %v276
      %293 = vst [vmem:[#allocation2 + $0x30] sm:$0xff] %v277
      %294 = vst [vmem:[#allocation2 + $0x38] sm:$0xff] %v278
      %295 = vst [vmem:[#allocation2 + $0x40] sm:$0xff] %v279
      %296 = vst [vmem:[#allocation2 + $0x48] sm:$0xff] %v280
      %297 = vst [vmem:[#allocation2 + $0x50] sm:$0xff] %v281
      %298 = vst [vmem:[#allocation2 + $0x58] sm:$0xff] %v282
      %299 = vst [vmem:[#allocation2 + $0x60] sm:$0xff] %v283
      %300 = vst [vmem:[#allocation2 + $0x68] sm:$0xff] %v284
      %301 = vst [vmem:[#allocation2 + $0x70] sm:$0xff] %v285
      %302 = vst [vmem:[#allocation2 + $0x78] sm:$0xff] %v286
    $region41: #{tpu_custom_call.1} parent=1 // pred_fallthru
      _
    // Predicated region
    $region42: #{tpu_custom_call.1} parent=1 // pred_check
      %p303 = pneg %p231
    $region43: #{tpu_custom_call.1} parent=1 // pred_check_branch
      %305 = sbr.rel (%p303) target = $region45
    $region44: #{tpu_custom_call.1} parent=1 // pred_region
      %v306 = vld [vmem:[#allocation2] sm:$0xff]
      %v307 = vld [vmem:[#allocation2 + $0x8] sm:$0xff]
      %v308 = vld [vmem:[#allocation2 + $0x10] sm:$0xff]
      %v309 = vld [vmem:[#allocation2 + $0x18] sm:$0xff]
      %v310 = vld [vmem:[#allocation2 + $0x20] sm:$0xff]
      %v311 = vld [vmem:[#allocation2 + $0x28] sm:$0xff]
      %v312 = vld [vmem:[#allocation2 + $0x30] sm:$0xff]
      %v313 = vld [vmem:[#allocation2 + $0x38] sm:$0xff]
      %v314 = vld [vmem:[#allocation2 + $0x40] sm:$0xff]
      %v315 = vld [vmem:[#allocation2 + $0x48] sm:$0xff]
      %v316 = vld [vmem:[#allocation2 + $0x50] sm:$0xff]
      %v317 = vld [vmem:[#allocation2 + $0x58] sm:$0xff]
      %v318 = vld [vmem:[#allocation2 + $0x60] sm:$0xff]
      %v319 = vld [vmem:[#allocation2 + $0x68] sm:$0xff]
      %v320 = vld [vmem:[#allocation2 + $0x70] sm:$0xff]
      %v321 = vld [vmem:[#allocation2 + $0x78] sm:$0xff]
      %v322 = vld [vmem:[%s2] sm:$0xff]
      %v323 = vld [vmem:[%s2 + $0x8] sm:$0xff]
      %v324 = vld [vmem:[%s2 + $0x10] sm:$0xff]
      %v325 = vld [vmem:[%s2 + $0x18] sm:$0xff]
      %v326 = vld [vmem:[%s2 + $0x20] sm:$0xff]
      %v327 = vld [vmem:[%s2 + $0x28] sm:$0xff]
      %v328 = vld [vmem:[%s2 + $0x30] sm:$0xff]
      %v329 = vld [vmem:[%s2 + $0x38] sm:$0xff]
      %v330 = vld [vmem:[%s2 + $0x40] sm:$0xff]
      %v331 = vld [vmem:[%s2 + $0x48] sm:$0xff]
      %v332 = vld [vmem:[%s2 + $0x50] sm:$0xff]
      %v333 = vld [vmem:[%s2 + $0x58] sm:$0xff]
      %v334 = vld [vmem:[%s2 + $0x60] sm:$0xff]
      %v335 = vld [vmem:[%s2 + $0x68] sm:$0xff]
      %v336 = vld [vmem:[%s2 + $0x70] sm:$0xff]
      %v337 = vld [vmem:[%s2 + $0x78] sm:$0xff]
      %339 = vset.pattern.permute.xlu0 0
      %340 = vperm.xlu0 %339, %v322
      %v341 = vpop.permute.xlu0 %340
      %344 = vset.pattern.permute.xlu0 0
      %345 = vperm.xlu0 %344, %v323
      %v346 = vpop.permute.xlu0 %345
      %349 = vset.pattern.permute.xlu0 0
      %350 = vperm.xlu0 %349, %v324
      %v351 = vpop.permute.xlu0 %350
      %354 = vset.pattern.permute.xlu0 0
      %355 = vperm.xlu0 %354, %v325
      %v356 = vpop.permute.xlu0 %355
      %359 = vset.pattern.permute.xlu0 0
      %360 = vperm.xlu0 %359, %v326
      %v361 = vpop.permute.xlu0 %360
      %364 = vset.pattern.permute.xlu0 0
      %365 = vperm.xlu0 %364, %v327
      %v366 = vpop.permute.xlu0 %365
      %369 = vset.pattern.permute.xlu0 0
      %370 = vperm.xlu0 %369, %v328
      %v371 = vpop.permute.xlu0 %370
      %374 = vset.pattern.permute.xlu0 0
      %375 = vperm.xlu0 %374, %v329
      %v376 = vpop.permute.xlu0 %375
      %379 = vset.pattern.permute.xlu0 0
      %380 = vperm.xlu0 %379, %v330
      %v381 = vpop.permute.xlu0 %380
      %384 = vset.pattern.permute.xlu0 0
      %385 = vperm.xlu0 %384, %v331
      %v386 = vpop.permute.xlu0 %385
      %389 = vset.pattern.permute.xlu0 0
      %390 = vperm.xlu0 %389, %v332
      %v391 = vpop.permute.xlu0 %390
      %394 = vset.pattern.permute.xlu0 0
      %395 = vperm.xlu0 %394, %v333
      %v396 = vpop.permute.xlu0 %395
      %399 = vset.pattern.permute.xlu0 0
      %400 = vperm.xlu0 %399, %v334
      %v401 = vpop.permute.xlu0 %400
      %404 = vset.pattern.permute.xlu0 0
      %405 = vperm.xlu0 %404, %v335
      %v406 = vpop.permute.xlu0 %405
      %409 = vset.pattern.permute.xlu0 0
      %410 = vperm.xlu0 %409, %v336
      %v411 = vpop.permute.xlu0 %410
      %414 = vset.pattern.permute.xlu0 0
      %415 = vperm.xlu0 %414, %v337
      %v416 = vpop.permute.xlu0 %415
      %v418 = vmul.f32 %v306, %v341
      %v419 = vmul.f32 %v307, %v346
      %v420 = vmul.f32 %v308, %v351
      %v421 = vmul.f32 %v309, %v356
      %v422 = vmul.f32 %v310, %v361
      %v423 = vmul.f32 %v311, %v366
      %v424 = vmul.f32 %v312, %v371
      %v425 = vmul.f32 %v313, %v376
      %v426 = vmul.f32 %v314, %v381
      %v427 = vmul.f32 %v315, %v386
      %v428 = vmul.f32 %v316, %v391
      %v429 = vmul.f32 %v317, %v396
      %v430 = vmul.f32 %v318, %v401
      %v431 = vmul.f32 %v319, %v406
      %v432 = vmul.f32 %v320, %v411
      %v433 = vmul.f32 %v321, %v416
      %v434 = vpack.c.bf16 %v419, %v418
      %v435 = vpack.c.bf16 %v421, %v420
      %v436 = vpack.c.bf16 %v423, %v422
      %v437 = vpack.c.bf16 %v425, %v424
      %v438 = vpack.c.bf16 %v427, %v426
      %v439 = vpack.c.bf16 %v429, %v428
      %v440 = vpack.c.bf16 %v431, %v430
      %v441 = vpack.c.bf16 %v433, %v432
      %s442 = smul.u32 0, 128
      %s443 = sshra.s32 %s442, 3
      %s444 = sand.u32 %s442, 7
      %s445 = smul.addr %s443, 4
      %s446 = scalar_lea.vmem %s1, %s445
      %v447 = vld [vmem:[%s446] sm:$0xf]
      %v448 = vld [vmem:[%s446 + $0x4] sm:$0xf]
      %v449 = vld [vmem:[%s446 + $0x8] sm:$0xf]
      %v450 = vld [vmem:[%s446 + $0xc] sm:$0xf]
      %v451 = vld [vmem:[%s446 + $0x10] sm:$0xf]
      %v452 = vld [vmem:[%s446 + $0x14] sm:$0xf]
      %v453 = vld [vmem:[%s446 + $0x18] sm:$0xf]
      %v454 = vld [vmem:[%s446 + $0x1c] sm:$0xf]
      %v455 = vld [vmem:[%s446 + $0x20] sm:$0xf]
      %v456 = vld [vmem:[%s446 + $0x24] sm:$0xf]
      %v457 = vld [vmem:[%s446 + $0x28] sm:$0xf]
      %v458 = vld [vmem:[%s446 + $0x2c] sm:$0xf]
      %v459 = vld [vmem:[%s446 + $0x30] sm:$0xf]
      %v460 = vld [vmem:[%s446 + $0x34] sm:$0xf]
      %v461 = vld [vmem:[%s446 + $0x38] sm:$0xf]
      %v462 = vld [vmem:[%s446 + $0x3c] sm:$0xf]
      %v463 = vld [vmem:[%s3] sm:$0xf]
      %v464 = vld [vmem:[%s3 + $0x4] sm:$0xf]
      %v465 = vld [vmem:[%s3 + $0x8] sm:$0xf]
      %v466 = vld [vmem:[%s3 + $0xc] sm:$0xf]
      %v467 = vld [vmem:[%s3 + $0x10] sm:$0xf]
      %v468 = vld [vmem:[%s3 + $0x14] sm:$0xf]
      %v469 = vld [vmem:[%s3 + $0x18] sm:$0xf]
      %v470 = vld [vmem:[%s3 + $0x1c] sm:$0xf]
      %v471 = vld [vmem:[%s3 + $0x20] sm:$0xf]
      %v472 = vld [vmem:[%s3 + $0x24] sm:$0xf]
      %v473 = vld [vmem:[%s3 + $0x28] sm:$0xf]
      %v474 = vld [vmem:[%s3 + $0x2c] sm:$0xf]
      %v475 = vld [vmem:[%s3 + $0x30] sm:$0xf]
      %v476 = vld [vmem:[%s3 + $0x34] sm:$0xf]
      %v477 = vld [vmem:[%s3 + $0x38] sm:$0xf]
      %v478 = vld [vmem:[%s3 + $0x3c] sm:$0xf]
      %v479 = vld [vmem:[#allocation6] sm:$0xf]
      %v480 = vld [vmem:[#allocation6 + $0x4] sm:$0xf]
      %v481 = vld [vmem:[#allocation6 + $0x8] sm:$0xf]
      %v482 = vld [vmem:[#allocation6 + $0xc] sm:$0xf]
      %v483 = vld [vmem:[#allocation6 + $0x10] sm:$0xf]
      %v484 = vld [vmem:[#allocation6 + $0x14] sm:$0xf]
      %v485 = vld [vmem:[#allocation6 + $0x18] sm:$0xf]
      %v486 = vld [vmem:[#allocation6 + $0x1c] sm:$0xf]
      %v487 = vld [vmem:[#allocation6 + $0x20] sm:$0xf]
      %v488 = vld [vmem:[#allocation6 + $0x24] sm:$0xf]
      %v489 = vld [vmem:[#allocation6 + $0x28] sm:$0xf]
      %v490 = vld [vmem:[#allocation6 + $0x2c] sm:$0xf]
      %v491 = vld [vmem:[#allocation6 + $0x30] sm:$0xf]
      %v492 = vld [vmem:[#allocation6 + $0x34] sm:$0xf]
      %v493 = vld [vmem:[#allocation6 + $0x38] sm:$0xf]
      %v494 = vld [vmem:[#allocation6 + $0x3c] sm:$0xf]
      %v511 = vunpack.c.l.b16 %v447
      %v512 = vunpack.c.l.b16 %v448
      %v513 = vunpack.c.l.b16 %v449
      %v514 = vunpack.c.l.b16 %v450
      %v515 = vunpack.c.l.b16 %v451
      %v516 = vunpack.c.l.b16 %v452
      %v517 = vunpack.c.l.b16 %v453
      %v518 = vunpack.c.l.b16 %v454
      %v519 = vunpack.c.l.b16 %v455
      %v520 = vunpack.c.l.b16 %v456
      %v521 = vunpack.c.l.b16 %v457
      %v522 = vunpack.c.l.b16 %v458
      %v523 = vunpack.c.l.b16 %v459
      %v524 = vunpack.c.l.b16 %v460
      %v525 = vunpack.c.l.b16 %v461
      %v526 = vunpack.c.l.b16 %v462
      %v527 = vpack.c.b16 %v512, %v511
      %v528 = vpack.c.b16 %v514, %v513
      %v529 = vpack.c.b16 %v516, %v515
      %v530 = vpack.c.b16 %v518, %v517
      %v531 = vpack.c.b16 %v520, %v519
      %v532 = vpack.c.b16 %v522, %v521
      %v533 = vpack.c.b16 %v524, %v523
      %v534 = vpack.c.b16 %v526, %v525
      %v559 = vunpack.c.l.b16 %v479
      %v560 = vunpack.c.l.b16 %v480
      %v561 = vunpack.c.l.b16 %v481
      %v562 = vunpack.c.l.b16 %v482
      %v563 = vunpack.c.l.b16 %v483
      %v564 = vunpack.c.l.b16 %v484
      %v565 = vunpack.c.l.b16 %v485
      %v566 = vunpack.c.l.b16 %v486
      %v567 = vunpack.c.l.b16 %v487
      %v568 = vunpack.c.l.b16 %v488
      %v569 = vunpack.c.l.b16 %v489
      %v570 = vunpack.c.l.b16 %v490
      %v571 = vunpack.c.l.b16 %v491
      %v572 = vunpack.c.l.b16 %v492
      %v573 = vunpack.c.l.b16 %v493
      %v574 = vunpack.c.l.b16 %v494
      %v575 = vpack.c.b16 %v560, %v559
      %v576 = vpack.c.b16 %v562, %v561
      %v577 = vpack.c.b16 %v564, %v563
      %v578 = vpack.c.b16 %v566, %v565
      %v579 = vpack.c.b16 %v568, %v567
      %v580 = vpack.c.b16 %v570, %v569
      %v581 = vpack.c.b16 %v572, %v571
      %v582 = vpack.c.b16 %v574, %v573
      %591 = vmatprep.subr.bf16.mxu0 0
      %592 = vmatpush1.bf16.msra.mxu0 %v582
      %593 = vmatprep.subr.bf16.mxu0 0
      %594 = vmatpush1.bf16.msra.mxu0 %v581
      %595 = vmatprep.subr.bf16.mxu0 0
      %596 = vmatpush1.bf16.msra.mxu0 %v580
      %597 = vmatprep.subr.bf16.mxu0 0
      %598 = vmatpush1.bf16.msra.mxu0 %v579
      %599 = vmatprep.subr.bf16.mxu0 0
      %600 = vmatpush1.bf16.msra.mxu0 %v578
      %601 = vmatprep.subr.bf16.mxu0 0
      %602 = vmatpush1.bf16.msra.mxu0 %v577
      %603 = vmatprep.subr.bf16.mxu0 0
      %604 = vmatpush1.bf16.msra.mxu0 %v576
      %605 = vmatprep.subr.bf16.mxu0 0
      %606 = vmatpush1.bf16.msra.mxu0 %v575
      %607 = vmatprep.subr.bf16.mxu0 0
      %608 = vmatpush2.bf16.msra.mxu0 0
      %609 = vmatprep.subr.bf16.mxu0 0
      %610 = vmatpush2.bf16.msra.mxu0 0
      %611 = vmatprep.subr.bf16.mxu0 0
      %612 = vmatpush2.bf16.msra.mxu0 0
      %613 = vmatprep.subr.bf16.mxu0 0
      %614 = vmatpush2.bf16.msra.mxu0 0
      %615 = vmatprep.subr.bf16.mxu0 0
      %616 = vmatpush2.bf16.msra.mxu0 0
      %617 = vmatprep.subr.bf16.mxu0 0
      %618 = vmatpush2.bf16.msra.mxu0 0
      %619 = vmatprep.subr.bf16.mxu0 0
      %620 = vmatpush2.bf16.msra.mxu0 0
      %621 = vmatprep.subr.bf16.mxu0 0
      %622 = vmatpush2.bf16.msra.mxu0 0
      %623 = vmatprep.mubr.bf16.mxu0 0
      %624 = vmatmul.mubr.bf16.gmra.mxu0 %v527
      %v625 = vpop.f32.mrf.mxu0
      %v626 = vadd.f32 0.0, %v625
      %v627 = vpop.f32.mrf.mxu0
      %v628 = vpop.f32.mrf.mxu0
      %v629 = vadd.f32 0.0, %v628
      %v630 = vpop.f32.mrf.mxu0
      %631 = vmatprep.mubr.bf16.mxu0 0
      %632 = vmatmul.mubr.bf16.gmra.mxu0 %v528
      %v633 = vpop.f32.mrf.mxu0
      %v634 = vadd.f32 0.0, %v633
      %v635 = vpop.f32.mrf.mxu0
      %v636 = vpop.f32.mrf.mxu0
      %v637 = vadd.f32 0.0, %v636
      %v638 = vpop.f32.mrf.mxu0
      %639 = vmatprep.mubr.bf16.mxu0 0
      %640 = vmatmul.mubr.bf16.gmra.mxu0 %v529
      %v641 = vpop.f32.mrf.mxu0
      %v642 = vadd.f32 0.0, %v641
      %v643 = vpop.f32.mrf.mxu0
      %v644 = vpop.f32.mrf.mxu0
      %v645 = vadd.f32 0.0, %v644
      %v646 = vpop.f32.mrf.mxu0
      %647 = vmatprep.mubr.bf16.mxu0 0
      %648 = vmatmul.mubr.bf16.gmra.mxu0 %v530
      %v649 = vpop.f32.mrf.mxu0
      %v650 = vadd.f32 0.0, %v649
      %v651 = vpop.f32.mrf.mxu0
      %v652 = vpop.f32.mrf.mxu0
      %v653 = vadd.f32 0.0, %v652
      %v654 = vpop.f32.mrf.mxu0
      %655 = vmatprep.mubr.bf16.mxu0 0
      %656 = vmatmul.mubr.bf16.gmra.mxu0 %v531
      %v657 = vpop.f32.mrf.mxu0
      %v658 = vadd.f32 0.0, %v657
      %v659 = vpop.f32.mrf.mxu0
      %v660 = vpop.f32.mrf.mxu0
      %v661 = vadd.f32 0.0, %v660
      %v662 = vpop.f32.mrf.mxu0
      %663 = vmatprep.mubr.bf16.mxu0 0
      %664 = vmatmul.mubr.bf16.gmra.mxu0 %v532
      %v665 = vpop.f32.mrf.mxu0
      %v666 = vadd.f32 0.0, %v665
      %v667 = vpop.f32.mrf.mxu0
      %v668 = vpop.f32.mrf.mxu0
      %v669 = vadd.f32 0.0, %v668
      %v670 = vpop.f32.mrf.mxu0
      %671 = vmatprep.mubr.bf16.mxu0 0
      %672 = vmatmul.mubr.bf16.gmra.mxu0 %v533
      %v673 = vpop.f32.mrf.mxu0
      %v674 = vadd.f32 0.0, %v673
      %v675 = vpop.f32.mrf.mxu0
      %v676 = vpop.f32.mrf.mxu0
      %v677 = vadd.f32 0.0, %v676
      %v678 = vpop.f32.mrf.mxu0
      %679 = vmatprep.mubr.bf16.mxu0 0
      %680 = vmatmul.mubr.bf16.gmra.mxu0 %v534
      %v681 = vpop.f32.mrf.mxu0
      %v682 = vadd.f32 0.0, %v681
      %v683 = vpop.f32.mrf.mxu0
      %v684 = vpop.f32.mrf.mxu0
      %v685 = vadd.f32 0.0, %v684
      %v686 = vpop.f32.mrf.mxu0
      %687 = vdwg.mxu0
      %v704 = vunpack.c.l.b16 %v463
      %v705 = vunpack.c.l.b16 %v464
      %v706 = vunpack.c.l.b16 %v465
      %v707 = vunpack.c.l.b16 %v466
      %v708 = vunpack.c.l.b16 %v467
      %v709 = vunpack.c.l.b16 %v468
      %v710 = vunpack.c.l.b16 %v469
      %v711 = vunpack.c.l.b16 %v470
      %v712 = vunpack.c.l.b16 %v471
      %v713 = vunpack.c.l.b16 %v472
      %v714 = vunpack.c.l.b16 %v473
      %v715 = vunpack.c.l.b16 %v474
      %v716 = vunpack.c.l.b16 %v475
      %v717 = vunpack.c.l.b16 %v476
      %v718 = vunpack.c.l.b16 %v477
      %v719 = vunpack.c.l.b16 %v478
      %v720 = vpack.c.b16 %v705, %v704
      %v721 = vpack.c.b16 %v707, %v706
      %v722 = vpack.c.b16 %v709, %v708
      %v723 = vpack.c.b16 %v711, %v710
      %v724 = vpack.c.b16 %v713, %v712
      %v725 = vpack.c.b16 %v715, %v714
      %v726 = vpack.c.b16 %v717, %v716
      %v727 = vpack.c.b16 %v719, %v718
      %736 = vmatprep.subr.bf16.mxu0 0
      %737 = vmatpush1.bf16.msra.mxu0 %v727
      %738 = vmatprep.subr.bf16.mxu0 0
      %739 = vmatpush1.bf16.msra.mxu0 %v726
      %740 = vmatprep.subr.bf16.mxu0 0
      %741 = vmatpush1.bf16.msra.mxu0 %v725
      %742 = vmatprep.subr.bf16.mxu0 0
      %743 = vmatpush1.bf16.msra.mxu0 %v724
      %744 = vmatprep.subr.bf16.mxu0 0
      %745 = vmatpush1.bf16.msra.mxu0 %v723
      %746 = vmatprep.subr.bf16.mxu0 0
      %747 = vmatpush1.bf16.msra.mxu0 %v722
      %748 = vmatprep.subr.bf16.mxu0 0
      %749 = vmatpush1.bf16.msra.mxu0 %v721
      %750 = vmatprep.subr.bf16.mxu0 0
      %751 = vmatpush1.bf16.msra.mxu0 %v720
      %752 = vmatprep.subr.bf16.mxu0 0
      %753 = vmatpush2.bf16.msra.mxu0 0
      %754 = vmatprep.subr.bf16.mxu0 0
      %755 = vmatpush2.bf16.msra.mxu0 0
      %756 = vmatprep.subr.bf16.mxu0 0
      %757 = vmatpush2.bf16.msra.mxu0 0
      %758 = vmatprep.subr.bf16.mxu0 0
      %759 = vmatpush2.bf16.msra.mxu0 0
      %760 = vmatprep.subr.bf16.mxu0 0
      %761 = vmatpush2.bf16.msra.mxu0 0
      %762 = vmatprep.subr.bf16.mxu0 0
      %763 = vmatpush2.bf16.msra.mxu0 0
      %764 = vmatprep.subr.bf16.mxu0 0
      %765 = vmatpush2.bf16.msra.mxu0 0
      %766 = vmatprep.subr.bf16.mxu0 0
      %767 = vmatpush2.bf16.msra.mxu0 0
      %768 = vmatprep.mubr.bf16.mxu0 0
      %769 = vmatmul.mubr.bf16.gmra.mxu0 %v434
      %v770 = vpop.f32.mrf.mxu0
      %v771 = vadd.f32 %v626, %v770
      %v772 = vpop.f32.mrf.mxu0
      %v773 = vpop.f32.mrf.mxu0
      %v774 = vadd.f32 %v629, %v773
      %v775 = vpop.f32.mrf.mxu0
      %776 = vmatprep.mubr.bf16.mxu0 0
      %777 = vmatmul.mubr.bf16.gmra.mxu0 %v435
      %v778 = vpop.f32.mrf.mxu0
      %v779 = vadd.f32 %v634, %v778
      %v780 = vpop.f32.mrf.mxu0
      %v781 = vpop.f32.mrf.mxu0
      %v782 = vadd.f32 %v637, %v781
      %v783 = vpop.f32.mrf.mxu0
      %784 = vmatprep.mubr.bf16.mxu0 0
      %785 = vmatmul.mubr.bf16.gmra.mxu0 %v436
      %v786 = vpop.f32.mrf.mxu0
      %v787 = vadd.f32 %v642, %v786
      %v788 = vpop.f32.mrf.mxu0
      %v789 = vpop.f32.mrf.mxu0
      %v790 = vadd.f32 %v645, %v789
      %v791 = vpop.f32.mrf.mxu0
      %792 = vmatprep.mubr.bf16.mxu0 0
      %793 = vmatmul.mubr.bf16.gmra.mxu0 %v437
      %v794 = vpop.f32.mrf.mxu0
      %v795 = vadd.f32 %v650, %v794
      %v796 = vpop.f32.mrf.mxu0
      %v797 = vpop.f32.mrf.mxu0
      %v798 = vadd.f32 %v653, %v797
      %v799 = vpop.f32.mrf.mxu0
      %800 = vmatprep.mubr.bf16.mxu0 0
      %801 = vmatmul.mubr.bf16.gmra.mxu0 %v438
      %v802 = vpop.f32.mrf.mxu0
      %v803 = vadd.f32 %v658, %v802
      %v804 = vpop.f32.mrf.mxu0
      %v805 = vpop.f32.mrf.mxu0
      %v806 = vadd.f32 %v661, %v805
      %v807 = vpop.f32.mrf.mxu0
      %808 = vmatprep.mubr.bf16.mxu0 0
      %809 = vmatmul.mubr.bf16.gmra.mxu0 %v439
      %v810 = vpop.f32.mrf.mxu0
      %v811 = vadd.f32 %v666, %v810
      %v812 = vpop.f32.mrf.mxu0
      %v813 = vpop.f32.mrf.mxu0
      %v814 = vadd.f32 %v669, %v813
      %v815 = vpop.f32.mrf.mxu0
      %816 = vmatprep.mubr.bf16.mxu0 0
      %817 = vmatmul.mubr.bf16.gmra.mxu0 %v440
      %v818 = vpop.f32.mrf.mxu0
      %v819 = vadd.f32 %v674, %v818
      %v820 = vpop.f32.mrf.mxu0
      %v821 = vpop.f32.mrf.mxu0
      %v822 = vadd.f32 %v677, %v821
      %v823 = vpop.f32.mrf.mxu0
      %824 = vmatprep.mubr.bf16.mxu0 0
      %825 = vmatmul.mubr.bf16.gmra.mxu0 %v441
      %v826 = vpop.f32.mrf.mxu0
      %v827 = vadd.f32 %v682, %v826
      %v828 = vpop.f32.mrf.mxu0
      %v829 = vpop.f32.mrf.mxu0
      %v830 = vadd.f32 %v685, %v829
      %v831 = vpop.f32.mrf.mxu0
      %832 = vdwg.mxu0
      %v833 = vld [vmem:[%s5] sm:$0x1]
      %v835 = vlaneseq
      %v836 = vshrl.u32 %v835, 7
      %v837 = vsub.s32 0, %v836
      %v838 = vrot.slane %v833, %v837
      %v840 = vadd.f32 %v771, %v838
      %v841 = vadd.f32 %v774, %v838
      %v842 = vadd.f32 %v779, %v838
      %v843 = vadd.f32 %v782, %v838
      %v844 = vadd.f32 %v787, %v838
      %v845 = vadd.f32 %v790, %v838
      %v846 = vadd.f32 %v795, %v838
      %v847 = vadd.f32 %v798, %v838
      %v848 = vadd.f32 %v803, %v838
      %v849 = vadd.f32 %v806, %v838
      %v850 = vadd.f32 %v811, %v838
      %v851 = vadd.f32 %v814, %v838
      %v852 = vadd.f32 %v819, %v838
      %v853 = vadd.f32 %v822, %v838
      %v854 = vadd.f32 %v827, %v838
      %v855 = vadd.f32 %v830, %v838
      %v856 = vmax.f32 %v840, 0.0
      %v857 = vmax.f32 %v841, 0.0
      %v858 = vmax.f32 %v842, 0.0
      %v859 = vmax.f32 %v843, 0.0
      %v860 = vmax.f32 %v844, 0.0
      %v861 = vmax.f32 %v845, 0.0
      %v862 = vmax.f32 %v846, 0.0
      %v863 = vmax.f32 %v847, 0.0
      %v864 = vmax.f32 %v848, 0.0
      %v865 = vmax.f32 %v849, 0.0
      %v866 = vmax.f32 %v850, 0.0
      %v867 = vmax.f32 %v851, 0.0
      %v868 = vmax.f32 %v852, 0.0
      %v869 = vmax.f32 %v853, 0.0
      %v870 = vmax.f32 %v854, 0.0
      %v871 = vmax.f32 %v855, 0.0
      %v872 = vpack.c.bf16 %v857, %v856
      %v873 = vpack.c.bf16 %v859, %v858
      %v874 = vpack.c.bf16 %v861, %v860
      %v875 = vpack.c.bf16 %v863, %v862
      %v876 = vpack.c.bf16 %v865, %v864
      %v877 = vpack.c.bf16 %v867, %v866
      %v878 = vpack.c.bf16 %v869, %v868
      %v879 = vpack.c.bf16 %v871, %v870
      %v888 = vunpack.c.l.b16 %v872
      %v889 = vunpack.c.h.b16 %v872
      %v890 = vunpack.c.l.b16 %v873
      %v891 = vunpack.c.h.b16 %v873
      %v892 = vunpack.c.l.b16 %v874
      %v893 = vunpack.c.h.b16 %v874
      %v894 = vunpack.c.l.b16 %v875
      %v895 = vunpack.c.h.b16 %v875
      %v896 = vunpack.c.l.b16 %v876
      %v897 = vunpack.c.h.b16 %v876
      %v898 = vunpack.c.l.b16 %v877
      %v899 = vunpack.c.h.b16 %v877
      %v900 = vunpack.c.l.b16 %v878
      %v901 = vunpack.c.h.b16 %v878
      %v902 = vunpack.c.l.b16 %v879
      %v903 = vunpack.c.h.b16 %v879
      %v904 = vpack.c.b16 %v888, %v888
      %v905 = vpack.c.b16 %v889, %v889
      %v906 = vpack.c.b16 %v890, %v890
      %v907 = vpack.c.b16 %v891, %v891
      %v908 = vpack.c.b16 %v892, %v892
      %v909 = vpack.c.b16 %v893, %v893
      %v910 = vpack.c.b16 %v894, %v894
      %v911 = vpack.c.b16 %v895, %v895
      %v912 = vpack.c.b16 %v896, %v896
      %v913 = vpack.c.b16 %v897, %v897
      %v914 = vpack.c.b16 %v898, %v898
      %v915 = vpack.c.b16 %v899, %v899
      %v916 = vpack.c.b16 %v900, %v900
      %v917 = vpack.c.b16 %v901, %v901
      %v918 = vpack.c.b16 %v902, %v902
      %v919 = vpack.c.b16 %v903, %v903
      %936 = vst [vmem:[#allocation8] sm:$0xf] %v904
      %937 = vst [vmem:[#allocation8 + $0x4] sm:$0xf] %v905
      %938 = vst [vmem:[#allocation8 + $0x8] sm:$0xf] %v906
      %939 = vst [vmem:[#allocation8 + $0xc] sm:$0xf] %v907
      %940 = vst [vmem:[#allocation8 + $0x10] sm:$0xf] %v908
      %941 = vst [vmem:[#allocation8 + $0x14] sm:$0xf] %v909
      %942 = vst [vmem:[#allocation8 + $0x18] sm:$0xf] %v910
      %943 = vst [vmem:[#allocation8 + $0x1c] sm:$0xf] %v911
      %944 = vst [vmem:[#allocation8 + $0x20] sm:$0xf] %v912
      %945 = vst [vmem:[#allocation8 + $0x24] sm:$0xf] %v913
      %946 = vst [vmem:[#allocation8 + $0x28] sm:$0xf] %v914
      %947 = vst [vmem:[#allocation8 + $0x2c] sm:$0xf] %v915
      %948 = vst [vmem:[#allocation8 + $0x30] sm:$0xf] %v916
      %949 = vst [vmem:[#allocation8 + $0x34] sm:$0xf] %v917
      %950 = vst [vmem:[#allocation8 + $0x38] sm:$0xf] %v918
      %951 = vst [vmem:[#allocation8 + $0x3c] sm:$0xf] %v919
    $region45: #{tpu_custom_call.1} parent=1 // pred_fallthru
      _
    // Predicated region
    $region46: #{tpu_custom_call.1} parent=1 // pred_check
      _
    $region47: #{tpu_custom_call.1} parent=1 // pred_check_branch
      %953 = sbr.rel (0) target = $region49
    $region48: #{tpu_custom_call.1} parent=1 // pred_region
      %s955 = ssub.s32 1024, 1024
      %956 = vsyncadd [#allocation5], %s955
      %s957 = sshll.u32 [#allocation8], 4
      %s958 = int_to_ptr.vmem [resolvable:$true] %s957
      %963 = dma.vmem_to_hbm [thread:$0]  %s958, 1024, %s6, [#allocation5], 64, 64, 4
    $region49: #{tpu_custom_call.1} parent=1 // pred_fallthru
      _
    // Predicated region
    $region50: #{tpu_custom_call.1} parent=1 // pred_check
      _
    $region51: #{tpu_custom_call.1} parent=1 // pred_check_branch
      %965 = sbr.rel (0) target = $region53
    $region52: #{tpu_custom_call.1} parent=1 // pred_region
      %966 = dma.done [#allocation5], 1024
    $region53: #{tpu_custom_call.1} parent=1 // pred_fallthru
      _
    %967 = vsyncpa [#allocation4], 1
    %968 = vsyncpa [#allocation7], 1
    %969 = vsyncpa [#allocation5], 1

</llo_original>
